<compile_context>
chip_gen: v7x
topology: tpu7x:2x2x1
jax: 0.10.0
libtpu: 0.0.40
codegen_flags: <defaults>
</compile_context>

<pallas_src>
import functools

import jax
import jax.numpy as jnp
from jax.experimental import pallas as pl
from jax.experimental.pallas import tpu as pltpu


def _masc_kernel(hidden_ref, mask_ref, labels_ref, wc_ref, ws_ref, b_ref,
                 lqw_ref, logits_ref, loss_ref, *, q, alpha, true_b, tile_b):
    tile = pl.program_id(0)

    h = hidden_ref[...]                      # (TB, S, H)  bf16 or f32
    tb = h.shape[0]

    # Mask: native int32 attention mask; exclude tokens 0..2 in-kernel
    # (replaces the [:, 3:] sublane slice; cheap VPU work hidden under DMA).
    m = mask_ref[...].astype(jnp.float32)    # (TB, S)
    tok = jax.lax.broadcasted_iota(jnp.int32, m.shape, 1)
    m = jnp.where(tok >= 3, m, 0.0)

    # Cast the tile once; all math in f32.
    xf = h.astype(jnp.float32)               # (TB, S, H)

    # Masked mean pooling over tokens.
    sen = jnp.sum(xf * m[:, :, None], axis=1)              # (TB, H)
    den = jnp.sum(m, axis=1, keepdims=True)                 # (TB, 1)
    den = jnp.where(den > 0.0, den, 1.0)                    # guard padded rows
    sen = sen / den                                         # exact divide (bit-close logits)

    # cat_emb = hidden[:, 1, :]
    cat = xf[:, 1, :]                                       # (TB, H)

    # logits = [cat, sen] @ W + b, done as two dots (no concat / relayout).
    logits = (jnp.dot(cat, wc_ref[...], preferred_element_type=jnp.float32)
              + jnp.dot(sen, ws_ref[...], preferred_element_type=jnp.float32)
              + b_ref[...])                                 # (TB, Cp)
    logits_ref[...] = logits

    # Softmax over classes; padded class columns carry bias -1e30 -> exp == 0.
    mx = jnp.max(logits, axis=1, keepdims=True)
    e = jnp.exp(logits - mx)
    probs = e * pl.reciprocal(jnp.sum(e, axis=1, keepdims=True), approx=True)

    # LQLoss gather-by-label via one-hot.
    lab = labels_ref[...]                                   # (TB, 1) int32
    col = jax.lax.broadcasted_iota(jnp.int32, probs.shape, 1)
    onehot = (col == lab).astype(jnp.float32)               # (TB, Cp)

    Yq = jnp.sum(probs * onehot, axis=1, keepdims=True)     # (TB, 1)
    lq = (1.0 - jnp.power(Yq, q)) / q
    wg = jnp.sum(lqw_ref[...] * onehot, axis=1, keepdims=True)

    # Per-row loss contributions; batch-padding rows selected to 0 (where, not
    # multiply, so any garbage in padded rows can never propagate).
    row = tile * tile_b + jax.lax.broadcasted_iota(jnp.int32, (tb, 1), 0)
    contrib = alpha * lq + (1.0 - alpha) * lq * wg
    loss_ref[...] = jnp.where(row < true_b, contrib, 0.0)


def bert_linear_masc(hidden, attention_mask, labels, W, b, lq_weight,
                     q=0.4, alpha=0.0, tile_b=8):
    """hidden: (B,S,H) bf16/f32; attention_mask: (B,S); labels: (B,) int;
       W: (2H,C); b: (C,); lq_weight: (C,) (pre-softmaxed class weights)."""
    B, S, H = hidden.shape
    C = W.shape[1]

    num_tiles = pl.cdiv(B, tile_b)
    B_pad = num_tiles * tile_b
    Cp = ((C + 127) // 128) * 128              # lane-dense class dim

    def pad_rows(x):
        pad = B_pad - x.shape[0]
        if pad == 0:
            return x
        return jnp.pad(x, ((0, pad),) + ((0, 0),) * (x.ndim - 1))

    hidden_p = pad_rows(hidden)                               # keep native dtype
    mask_p = pad_rows(attention_mask.astype(jnp.int32))       # raw mask, no prescale
    labels_p = pad_rows(labels.astype(jnp.int32).reshape(B, 1))

    # Classifier params, class dim padded to Cp. Padded bias = -1e30 so the
    # padded classes vanish in softmax; padded lq-weights are never gathered.
    Wf = W.astype(jnp.float32)
    Wc = jnp.pad(Wf[:H, :], ((0, 0), (0, Cp - C)))            # (H, Cp) for cat_emb
    Ws = jnp.pad(Wf[H:, :], ((0, 0), (0, Cp - C)))            # (H, Cp) for sen_emb
    b2 = jnp.pad(b.astype(jnp.float32), (0, Cp - C),
                 constant_values=-1e30).reshape(1, Cp)
    lqw2 = jnp.pad(lq_weight.astype(jnp.float32), (0, Cp - C)).reshape(1, Cp)

    kernel = functools.partial(_masc_kernel, q=q, alpha=alpha,
                               true_b=B, tile_b=tile_b)

    logits_pad, loss_rows = pl.pallas_call(
        kernel,
        out_shape=(
            jax.ShapeDtypeStruct((B_pad, Cp), jnp.float32),
            jax.ShapeDtypeStruct((B_pad, 1), jnp.float32),
        ),
        grid=(num_tiles,),
        in_specs=[
            pl.BlockSpec((tile_b, S, H), lambda i: (i, 0, 0)),   # hidden tile
            pl.BlockSpec((tile_b, S), lambda i: (i, 0)),         # mask tile (int32)
            pl.BlockSpec((tile_b, 1), lambda i: (i, 0)),         # labels tile
            pl.BlockSpec((H, Cp), lambda i: (0, 0)),             # W (cat half), resident
            pl.BlockSpec((H, Cp), lambda i: (0, 0)),             # W (sen half), resident
            pl.BlockSpec((1, Cp), lambda i: (0, 0)),             # bias, resident
            pl.BlockSpec((1, Cp), lambda i: (0, 0)),             # LQ class weights, resident
        ],
        out_specs=(
            pl.BlockSpec((tile_b, Cp), lambda i: (i, 0)),        # logits tile (lane-dense)
            pl.BlockSpec((tile_b, 1), lambda i: (i, 0)),         # per-row loss partials
        ),
        compiler_params=pltpu.CompilerParams(
            dimension_semantics=("parallel",)),
    )(hidden_p, mask_p, labels_p, Wc, Ws, b2, lqw2)

    loss = jnp.sum(loss_rows) / B
    logits = logits_pad[:B, :C]
    return loss, logits


def _reference(hidden_f32, attention_mask, labels, W, b, lq_weight,
               q=0.4, alpha=0.0):
    x = hidden_f32[:, 3:, :]
    msk = attention_mask[:, 3:].astype(jnp.float32)
    sen = jnp.sum(x * msk[:, :, None], axis=1) / jnp.sum(msk, axis=1, keepdims=True)
    cat = hidden_f32[:, 1, :]
    final = jnp.concatenate([cat, sen], axis=1)
    logits = final @ W + b
    probs = jax.nn.softmax(logits, axis=1)
    Yq = jnp.take_along_axis(probs, labels[:, None], axis=1)
    lq = (1.0 - jnp.power(Yq, q)) / q
    wg = lq_weight[labels][:, None]
    loss = jnp.mean(alpha * lq + (1 - alpha) * lq * wg)
    return loss, logits


if __name__ == "__main__":
    # Small stand-ins for (batch, seq, 768, num_class). B=10 exercises two
    # batch tiles plus batch padding; C=8 exercises the lane padding to 128.
    B, S, H, C = 10, 16, 32, 8

    key = jax.random.PRNGKey(0)
    k_h, k_w, k_b, k_len, k_lab = jax.random.split(key, 5)

    # Layer-11 BERT hidden states (synthetic), kept in bf16 in HBM.
    hidden = jax.random.normal(k_h, (B, S, H), dtype=jnp.float32).astype(jnp.bfloat16)

    # Attention mask: each row has between 6 and S valid tokens (>=4 so den>0).
    lengths = jax.random.randint(k_len, (B,), 6, S + 1)
    attention_mask = (jnp.arange(S)[None, :] < lengths[:, None]).astype(jnp.int32)

    # Labels.
    labels = jax.random.randint(k_lab, (B,), 0, C).astype(jnp.int32)

    # ff_class parameters: Linear(2H -> C), stored as (2H, C).
    W = jax.random.normal(k_w, (2 * H, C), dtype=jnp.float32) * 0.05
    b = jax.random.normal(k_b, (C,), dtype=jnp.float32) * 0.05

    # LQLoss class weights: weight = softmax(log(1 / class_dist)).
    class_dist = jnp.arange(1, C + 1, dtype=jnp.float32)
    class_dist = class_dist / jnp.sum(class_dist)
    lq_weight = jax.nn.softmax(jnp.log(1.0 / class_dist))

    loss, logits = bert_linear_masc(hidden, attention_mask, labels, W, b, lq_weight)
    jax.block_until_ready((loss, logits))

    ref_loss, ref_logits = _reference(hidden.astype(jnp.float32), attention_mask,
                                      labels, W, b, lq_weight)
    assert jnp.allclose(logits, ref_logits, atol=1e-4, rtol=1e-4), (
        jnp.max(jnp.abs(logits - ref_logits)))
    # Loss uses the EUP approx reciprocal in the softmax denominator -> ~1e-4
    # relative error is expected; compare with a slightly looser tolerance.
    assert jnp.allclose(loss, ref_loss, atol=1e-3, rtol=1e-3), (loss, ref_loss)

    print("KERNEL_OK")
</pallas_src>

<mosaic_0001>
module attributes {stable_mosaic.version = 11 : i64} {
  func.func @_masc_kernel(%arg0: i32, %arg1: memref<8x16x32xbf16, #tpu.memory_space<vmem>>, %arg2: memref<8x16xi32, #tpu.memory_space<vmem>>, %arg3: memref<8x1xi32, #tpu.memory_space<vmem>>, %arg4: memref<32x128xf32, #tpu.memory_space<vmem>>, %arg5: memref<32x128xf32, #tpu.memory_space<vmem>>, %arg6: memref<1x128xf32, #tpu.memory_space<vmem>>, %arg7: memref<1x128xf32, #tpu.memory_space<vmem>>, %arg8: memref<8x128xf32, #tpu.memory_space<vmem>>, %arg9: memref<8x1xf32, #tpu.memory_space<vmem>>) attributes {dimension_semantics = [#tpu.dimension_semantics<parallel>], iteration_bounds = array<i64: 2>, scalar_prefetch = 0 : i64, scratch_operands = 0 : i64, tpu.core_type = #tpu.core_type<tc>, window_params = [{transform_indices = @transform_0, window_bounds = array<i64: 8, 16, 32>}, {transform_indices = @transform_1, window_bounds = array<i64: 8, 16>}, {transform_indices = @transform_2, window_bounds = array<i64: 8, 1>}, {pipeline_mode = #tpu.pipeline_mode<synchronous>, transform_indices = @transform_3, window_bounds = array<i64: 32, 128>}, {pipeline_mode = #tpu.pipeline_mode<synchronous>, transform_indices = @transform_4, window_bounds = array<i64: 32, 128>}, {pipeline_mode = #tpu.pipeline_mode<synchronous>, transform_indices = @transform_5, window_bounds = array<i64: 1, 128>}, {pipeline_mode = #tpu.pipeline_mode<synchronous>, transform_indices = @transform_6, window_bounds = array<i64: 1, 128>}, {transform_indices = @transform_7, window_bounds = array<i64: 8, 128>}, {transform_indices = @transform_8, window_bounds = array<i64: 8, 1>}]} {
    %c0 = arith.constant 0 : index
    %c0_0 = arith.constant 0 : index
    %c0_1 = arith.constant 0 : index
    %0 = vector.load %arg1[%c0, %c0_0, %c0_1] : memref<8x16x32xbf16, #tpu.memory_space<vmem>>, vector<8x16x32xbf16>
    %c0_2 = arith.constant 0 : index
    %c0_3 = arith.constant 0 : index
    %1 = vector.load %arg2[%c0_2, %c0_3] : memref<8x16xi32, #tpu.memory_space<vmem>>, vector<8x16xi32>
    %2 = arith.sitofp %1 : vector<8x16xi32> to vector<8x16xf32>
    %3 = tpu.iota {dimensions = array<i32: 1>} : vector<8x16xi32>
    %c3_i32 = arith.constant 3 : i32
    %4 = vector.broadcast %c3_i32 : i32 to vector<8x16xi32>
    %5 = arith.cmpi sge, %3, %4 : vector<8x16xi32>
    %cst = arith.constant 0.000000e+00 : f32
    %6 = vector.broadcast %cst : f32 to vector<8x16xf32>
    %7 = arith.select %5, %2, %6 : vector<8x16xi1>, vector<8x16xf32>
    %8 = arith.extf %0 : vector<8x16x32xbf16> to vector<8x16x32xf32>
    %9 = vector.shape_cast %7 : vector<8x16xf32> to vector<8x16x1xf32>
    %10 = vector.broadcast %9 : vector<8x16x1xf32> to vector<8x16x32xf32>
    %11 = arith.mulf %8, %10 : vector<8x16x32xf32>
    %cst_4 = arith.constant dense<0.000000e+00> : vector<8x32xf32>
    %12 = vector.multi_reduction <add>, %11, %cst_4 [1] : vector<8x16x32xf32> to vector<8x32xf32>
    %cst_5 = arith.constant dense<0.000000e+00> : vector<8xf32>
    %13 = vector.multi_reduction <add>, %7, %cst_5 [1] : vector<8x16xf32> to vector<8xf32>
    %14 = vector.shape_cast %13 : vector<8xf32> to vector<8x1xf32>
    %cst_6 = arith.constant 0.000000e+00 : f32
    %15 = vector.broadcast %cst_6 : f32 to vector<8x1xf32>
    %16 = arith.cmpf ogt, %14, %15 : vector<8x1xf32>
    %cst_7 = arith.constant 1.000000e+00 : f32
    %17 = vector.broadcast %cst_7 : f32 to vector<8x1xf32>
    %18 = arith.select %16, %14, %17 : vector<8x1xi1>, vector<8x1xf32>
    %19 = vector.broadcast %18 : vector<8x1xf32> to vector<8x32xf32>
    %20 = arith.divf %12, %19 : vector<8x32xf32>
    %21 = vector.extract_strided_slice %8 {offsets = [0, 1, 0], sizes = [8, 1, 32], strides = [1, 1, 1]} : vector<8x16x32xf32> to vector<8x1x32xf32>
    %22 = vector.shape_cast %21 : vector<8x1x32xf32> to vector<8x32xf32>
    %c0_8 = arith.constant 0 : index
    %c0_9 = arith.constant 0 : index
    %23 = vector.load %arg4[%c0_8, %c0_9] : memref<32x128xf32, #tpu.memory_space<vmem>>, vector<32x128xf32>
    %cst_10 = arith.constant dense<0.000000e+00> : vector<8x128xf32>
    %24 = tpu.matmul %22, %23, %cst_10 {dimension_numbers = #tpu.dot_dimension_numbers<[1], [0], [0], [1], [0, 0, 1, 1], [], []>} : vector<8x32xf32>, vector<32x128xf32>, vector<8x128xf32> -> vector<8x128xf32>
    %c0_11 = arith.constant 0 : index
    %c0_12 = arith.constant 0 : index
    %25 = vector.load %arg5[%c0_11, %c0_12] : memref<32x128xf32, #tpu.memory_space<vmem>>, vector<32x128xf32>
    %cst_13 = arith.constant dense<0.000000e+00> : vector<8x128xf32>
    %26 = tpu.matmul %20, %25, %cst_13 {dimension_numbers = #tpu.dot_dimension_numbers<[1], [0], [0], [1], [0, 0, 1, 1], [], []>} : vector<8x32xf32>, vector<32x128xf32>, vector<8x128xf32> -> vector<8x128xf32>
    %27 = arith.addf %24, %26 : vector<8x128xf32>
    %c0_14 = arith.constant 0 : index
    %c0_15 = arith.constant 0 : index
    %28 = vector.load %arg6[%c0_14, %c0_15] : memref<1x128xf32, #tpu.memory_space<vmem>>, vector<1x128xf32>
    %29 = vector.broadcast %28 : vector<1x128xf32> to vector<8x128xf32>
    %30 = arith.addf %27, %29 : vector<8x128xf32>
    %c0_16 = arith.constant 0 : index
    %c0_17 = arith.constant 0 : index
    %31 = vector.load %arg8[%c0_16, %c0_17] : memref<8x128xf32, #tpu.memory_space<vmem>>, vector<8x128xf32>
    tpu.vector_store %arg8[%c0_16, %c0_17], %30 {strides = array<i32>} : memref<8x128xf32, #tpu.memory_space<vmem>>, vector<8x128xf32>,
    %cst_18 = arith.constant dense<0xFF800000> : vector<8xf32>
    %32 = vector.multi_reduction <maximumf>, %30, %cst_18 [1] : vector<8x128xf32> to vector<8xf32>
    %33 = vector.shape_cast %32 : vector<8xf32> to vector<8x1xf32>
    %34 = vector.broadcast %33 : vector<8x1xf32> to vector<8x128xf32>
    %35 = arith.subf %30, %34 : vector<8x128xf32>
    %36 = math.exp %35 : vector<8x128xf32>
    %cst_19 = arith.constant dense<0.000000e+00> : vector<8xf32>
    %37 = vector.multi_reduction <add>, %36, %cst_19 [1] : vector<8x128xf32> to vector<8xf32>
    %38 = vector.shape_cast %37 : vector<8xf32> to vector<8x1xf32>
    %39 = tpu.reciprocal %38 {approx = true} : vector<8x1xf32> -> vector<8x1xf32>
    %40 = vector.broadcast %39 : vector<8x1xf32> to vector<8x128xf32>
    %41 = arith.mulf %36, %40 : vector<8x128xf32>
    %c0_20 = arith.constant 0 : index
    %c0_21 = arith.constant 0 : index
    %42 = vector.load %arg3[%c0_20, %c0_21] : memref<8x1xi32, #tpu.memory_space<vmem>>, vector<8x1xi32>
    %43 = tpu.iota {dimensions = array<i32: 1>} : vector<8x128xi32>
    %44 = vector.broadcast %42 : vector<8x1xi32> to vector<8x128xi32>
    %45 = arith.cmpi eq, %43, %44 : vector<8x128xi32>
    %46 = arith.extui %45 : vector<8x128xi1> to vector<8x128xi32>
    %47 = arith.sitofp %46 : vector<8x128xi32> to vector<8x128xf32>
    %48 = arith.mulf %41, %47 : vector<8x128xf32>
    %cst_22 = arith.constant dense<0.000000e+00> : vector<8xf32>
    %49 = vector.multi_reduction <add>, %48, %cst_22 [1] : vector<8x128xf32> to vector<8xf32>
    %50 = vector.shape_cast %49 : vector<8xf32> to vector<8x1xf32>
    %cst_23 = arith.constant 4.000000e-01 : f32
    %51 = vector.broadcast %cst_23 : f32 to vector<8x1xf32>
    %52 = math.powf %50, %51 : vector<8x1xf32>
    %cst_24 = arith.constant 1.000000e+00 : f32
    %53 = vector.broadcast %cst_24 : f32 to vector<8x1xf32>
    %54 = arith.subf %53, %52 : vector<8x1xf32>
    %cst_25 = arith.constant 4.000000e-01 : f32
    %55 = vector.broadcast %cst_25 : f32 to vector<8x1xf32>
    %56 = arith.divf %54, %55 : vector<8x1xf32>
    %c0_26 = arith.constant 0 : index
    %c0_27 = arith.constant 0 : index
    %57 = vector.load %arg7[%c0_26, %c0_27] : memref<1x128xf32, #tpu.memory_space<vmem>>, vector<1x128xf32>
    %58 = vector.broadcast %57 : vector<1x128xf32> to vector<8x128xf32>
    %59 = arith.mulf %58, %47 : vector<8x128xf32>
    %cst_28 = arith.constant dense<0.000000e+00> : vector<8xf32>
    %60 = vector.multi_reduction <add>, %59, %cst_28 [1] : vector<8x128xf32> to vector<8xf32>
    %61 = vector.shape_cast %60 : vector<8xf32> to vector<8x1xf32>
    %c8_i32 = arith.constant 8 : i32
    %62 = arith.muli %arg0, %c8_i32 : i32
    %63 = tpu.iota {dimensions = array<i32: 0>} : vector<8x1xi32>
    %64 = vector.broadcast %62 : i32 to vector<8x1xi32>
    %65 = arith.addi %64, %63 : vector<8x1xi32>
    %cst_29 = arith.constant 0.000000e+00 : f32
    %66 = vector.broadcast %cst_29 : f32 to vector<8x1xf32>
    %67 = arith.mulf %66, %56 : vector<8x1xf32>
    %cst_30 = arith.constant 1.000000e+00 : f32
    %68 = vector.broadcast %cst_30 : f32 to vector<8x1xf32>
    %69 = arith.mulf %68, %56 : vector<8x1xf32>
    %70 = arith.mulf %69, %61 : vector<8x1xf32>
    %71 = arith.addf %67, %70 : vector<8x1xf32>
    %c10_i32 = arith.constant 10 : i32
    %72 = vector.broadcast %c10_i32 : i32 to vector<8x1xi32>
    %73 = arith.cmpi slt, %65, %72 : vector<8x1xi32>
    %cst_31 = arith.constant 0.000000e+00 : f32
    %74 = vector.broadcast %cst_31 : f32 to vector<8x1xf32>
    %75 = arith.select %73, %71, %74 : vector<8x1xi1>, vector<8x1xf32>
    %c0_32 = arith.constant 0 : index
    %c0_33 = arith.constant 0 : index
    %76 = vector.load %arg9[%c0_32, %c0_33] : memref<8x1xf32, #tpu.memory_space<vmem>>, vector<8x1xf32>
    tpu.vector_store %arg9[%c0_32, %c0_33], %75 {strides = array<i32>} : memref<8x1xf32, #tpu.memory_space<vmem>>, vector<8x1xf32>,
    return
  }
  func.func @transform_0(%arg0: i32) -> (i32, i32, i32) {
    %c0_i32 = arith.constant 0 : i32
    %c0_i32_0 = arith.constant 0 : i32
    %c0_i32_1 = arith.constant 0 : i32
    return %arg0, %c0_i32, %c0_i32_0 : i32, i32, i32
  }
  func.func @transform_1(%arg0: i32) -> (i32, i32) {
    %c0_i32 = arith.constant 0 : i32
    %c0_i32_0 = arith.constant 0 : i32
    return %arg0, %c0_i32 : i32, i32
  }
  func.func @transform_2(%arg0: i32) -> (i32, i32) {
    %c0_i32 = arith.constant 0 : i32
    %c0_i32_0 = arith.constant 0 : i32
    return %arg0, %c0_i32 : i32, i32
  }
  func.func @transform_3(%arg0: i32) -> (i32, i32) {
    %c0_i32 = arith.constant 0 : i32
    %c0_i32_0 = arith.constant 0 : i32
    %c0_i32_1 = arith.constant 0 : i32
    return %c0_i32, %c0_i32_0 : i32, i32
  }
  func.func @transform_4(%arg0: i32) -> (i32, i32) {
    %c0_i32 = arith.constant 0 : i32
    %c0_i32_0 = arith.constant 0 : i32
    %c0_i32_1 = arith.constant 0 : i32
    return %c0_i32, %c0_i32_0 : i32, i32
  }
  func.func @transform_5(%arg0: i32) -> (i32, i32) {
    %c0_i32 = arith.constant 0 : i32
    %c0_i32_0 = arith.constant 0 : i32
    %c0_i32_1 = arith.constant 0 : i32
    return %c0_i32, %c0_i32_0 : i32, i32
  }
  func.func @transform_6(%arg0: i32) -> (i32, i32) {
    %c0_i32 = arith.constant 0 : i32
    %c0_i32_0 = arith.constant 0 : i32
    %c0_i32_1 = arith.constant 0 : i32
    return %c0_i32, %c0_i32_0 : i32, i32
  }
  func.func @transform_7(%arg0: i32) -> (i32, i32) {
    %c0_i32 = arith.constant 0 : i32
    %c0_i32_0 = arith.constant 0 : i32
    return %arg0, %c0_i32 : i32, i32
  }
  func.func @transform_8(%arg0: i32) -> (i32, i32) {
    %c0_i32 = arith.constant 0 : i32
    %c0_i32_0 = arith.constant 0 : i32
    return %arg0, %c0_i32 : i32, i32
  }
}

</mosaic_0001>

<llo_original>
// kernel: tpu_custom_call.1
$region0: #{tpu_custom_call.1}
  #allocation0 [shape = 'u32[]', space=smem, size = 0x4, offset = 0x4, fixed_abs, tag = 'smem constant byte address 0x4 - core index']
  #allocation1 [shape = 'u32[144,128]{1,0:T(1,128)}', space=vmem, size = 0x12000, scoped, tag = 'internal scratch']
  %s0 = inlined_call_operand.hbm [shape: bf16[16,16,32], index: 0, kind: input, shape index: {}]
  %s1 = inlined_call_operand.hbm [shape: s32[16,16], index: 1, kind: input, shape index: {}]
  %s2 = inlined_call_operand.vmem [shape: s32[16,1], index: 2, kind: input, shape index: {}]
  %s3 = inlined_call_operand.hbm [shape: f32[32,128], index: 3, kind: input, shape index: {}]
  %s4 = inlined_call_operand.vmem [shape: f32[32,128], index: 4, kind: input, shape index: {}]
  %s5 = inlined_call_operand.vmem [shape: f32[1,128], index: 5, kind: input, shape index: {}]
  %s6 = inlined_call_operand.vmem [shape: f32[1,128], index: 6, kind: input, shape index: {}]
  %s7 = inlined_call_operand.hbm [shape: f32[16,128], index: 7, kind: output, shape index: {0}]
  %s8 = inlined_call_operand.vmem [shape: f32[16,1], index: 8, kind: output, shape index: {1}]
  %9 = xla_tuple %s7, %s8
  %s10 = sld [smem:[#allocation0]]
  $region81: #{tpu_custom_call.1} parent=0
    _
  %s12 = ssub.s32 1, %s10
  %s13 = scalar_select 0, %s12, %s10
  $region1: #{tpu_custom_call.1} parent=0
    #allocation2 [shape = 'u8[65536]{0}', space=vmem, size = 0x10000, scoped, tag = 'input window, operand 0']
    #allocation3 [shape = 's32[2]{0}', space=sflag, size = 0x8, scoped, tag = 'scoped memory for tpu_custom_call.1']
    #allocation4 [shape = 's32[2]{0}', space=sflag, size = 0x8, scoped, tag = 'scoped memory for tpu_custom_call.1']
    #allocation5 [shape = 'u8[8192]{0}', space=vmem, size = 0x2000, scoped, tag = 'input window, operand 1']
    #allocation6 [shape = 's32[2]{0}', space=sflag, size = 0x8, scoped, tag = 'scoped memory for tpu_custom_call.1']
    #allocation7 [shape = 'u8[16384]{0}', space=vmem, size = 0x4000, scoped, tag = 'input window, operand 3, single buffered']
    #allocation8 [shape = 'u8[8192]{0}', space=vmem, size = 0x2000, scoped, tag = 'output window, operand 0']
    %14 = vsyncpa [#allocation3], 0
    %s15 = scalar_lea.sflag [#allocation3], 1
    %16 = vsyncpa %s15, 0
    %17 = vsyncpa [#allocation6], 0
    %s18 = scalar_lea.sflag [#allocation6], 1
    %19 = vsyncpa %s18, 0
    %20 = vsyncpa [#allocation4], 0
    %s21 = scalar_lea.sflag [#allocation4], 1
    %22 = vsyncpa %s21, 0
    loop: start=0, step=1, limit=4
    $region2: #{tpu_custom_call.1} parent=1 // loop_pre_header
      _
    $region3: #{tpu_custom_call.1} parent=1 // loop_header
      %s24 = sphi 0, %s28
      %p25 = scmp.ge.s32.totalorder %s24, 4
      %s34 = sphi 0, %s36
      %s37 = sphi 0, %s34
      %s38 = sphi 0, %s37
      %s54 = sphi 0, %s38
      %s60 = sphi 0, %s62
      %s63 = sphi 0, %s60
      %s64 = sphi 0, %s63
      %s80 = sphi 0, %s64
      %s86 = sphi 0, %s88
      %s89 = sphi 0, %s86
      %s90 = sphi 0, %s89
      %s106 = sphi 0, %s90
      %s110 = sphi 0, %s110
      %s112 = sphi 0, %s110
      %s113 = sphi 0, %s112
      %s127 = sphi 0, %s113
      %s131 = sphi 0, %s131
      %s133 = sphi 0, %s131
      %s134 = sphi 0, %s133
      %s148 = sphi 0, %s134
      %s152 = sphi 0, %s152
      %s154 = sphi 0, %s152
      %s155 = sphi 0, %s154
      %s169 = sphi 0, %s155
      %s173 = sphi 0, %s173
      %s175 = sphi 0, %s173
      %s176 = sphi 0, %s175
      %s190 = sphi 0, %s176
      %s196 = sphi 0, %s198
      %s199 = sphi 0, %s196
      %s200 = sphi 0, %s199
      %s216 = sphi 0, %s200
      %s222 = sphi 0, %s224
      %s225 = sphi 0, %s222
      %s226 = sphi 0, %s225
      %s242 = sphi 0, %s226
    $region4: #{tpu_custom_call.1} parent=1 // loop_header_branch
      %27 = sbr.rel (%p25) target = $region8
    $region5: #{tpu_custom_call.1} parent=1 // loop_body
      %s29 = ssub.s32 %s24, 1
      %s30 = ssub.s32 %s24, 2
      %s31 = sadd.s32 %s24, 1
      %s32 = ssub.s32 %s24, %s31
      %p33 = scmp.eq.s32.totalorder %s32, 0
      %s35 = sadd.s32 %s34, 1
      %s36 = scalar_select %p33, %s34, %s35
      %p39 = pneg %p33
      %p40 = scmp.eq.s32.totalorder %s24, 1
      %p41 = por %p39, %p40
      %p42 = scmp.ne.s32.totalorder %s34, %s37
      %p43 = scmp.eq.s32.totalorder %s24, 0
      %p44 = por %p42, %p43
      %p45 = scmp.ne.s32.totalorder %s34, %s37
      %p46 = scmp.eq.s32.totalorder %s29, 1
      %p47 = por %p45, %p46
      %p48 = scmp.ne.s32.totalorder %s37, %s38
      %p49 = scmp.eq.s32.totalorder %s29, 0
      %p50 = por %p48, %p49
      %p51 = scmp.ne.s32.totalorder %s37, %s38
      %p52 = scmp.eq.s32.totalorder %s30, 1
      %p53 = por %p51, %p52
      %p55 = scmp.ne.s32.totalorder %s38, %s54
      %p56 = scmp.eq.s32.totalorder %s30, 0
      %p57 = por %p55, %p56
      %s58 = ssub.s32 %s24, %s31
      %p59 = scmp.eq.s32.totalorder %s58, 0
      %s61 = sadd.s32 %s60, 1
      %s62 = scalar_select %p59, %s60, %s61
      %p65 = pneg %p59
      %p66 = scmp.eq.s32.totalorder %s24, 1
      %p67 = por %p65, %p66
      %p68 = scmp.ne.s32.totalorder %s60, %s63
      %p69 = scmp.eq.s32.totalorder %s24, 0
      %p70 = por %p68, %p69
      %p71 = scmp.ne.s32.totalorder %s60, %s63
      %p72 = scmp.eq.s32.totalorder %s29, 1
      %p73 = por %p71, %p72
      %p74 = scmp.ne.s32.totalorder %s63, %s64
      %p75 = scmp.eq.s32.totalorder %s29, 0
      %p76 = por %p74, %p75
      %p77 = scmp.ne.s32.totalorder %s63, %s64
      %p78 = scmp.eq.s32.totalorder %s30, 1
      %p79 = por %p77, %p78
      %p81 = scmp.ne.s32.totalorder %s64, %s80
      %p82 = scmp.eq.s32.totalorder %s30, 0
      %p83 = por %p81, %p82
      %s84 = ssub.s32 %s24, %s31
      %p85 = scmp.eq.s32.totalorder %s84, 0
      %s87 = sadd.s32 %s86, 1
      %s88 = scalar_select %p85, %s86, %s87
      %p91 = pneg %p85
      %p92 = scmp.eq.s32.totalorder %s24, 1
      %p93 = por %p91, %p92
      %p94 = scmp.ne.s32.totalorder %s86, %s89
      %p95 = scmp.eq.s32.totalorder %s24, 0
      %p96 = por %p94, %p95
      %p97 = scmp.ne.s32.totalorder %s86, %s89
      %p98 = scmp.eq.s32.totalorder %s29, 1
      %p99 = por %p97, %p98
      %p100 = scmp.ne.s32.totalorder %s89, %s90
      %p101 = scmp.eq.s32.totalorder %s29, 0
      %p102 = por %p100, %p101
      %p103 = scmp.ne.s32.totalorder %s89, %s90
      %p104 = scmp.eq.s32.totalorder %s30, 1
      %p105 = por %p103, %p104
      %p107 = scmp.ne.s32.totalorder %s90, %s106
      %p108 = scmp.eq.s32.totalorder %s30, 0
      %p109 = por %p107, %p108
      %s111 = sadd.s32 %s110, 1
      %p114 = scmp.eq.s32.totalorder %s24, 1
      %p115 = scmp.ne.s32.totalorder %s110, %s112
      %p116 = scmp.eq.s32.totalorder %s24, 0
      %p117 = por %p115, %p116
      %p118 = scmp.ne.s32.totalorder %s110, %s112
      %p119 = scmp.eq.s32.totalorder %s29, 1
      %p120 = por %p118, %p119
      %p121 = scmp.ne.s32.totalorder %s112, %s113
      %p122 = scmp.eq.s32.totalorder %s29, 0
      %p123 = por %p121, %p122
      %p124 = scmp.ne.s32.totalorder %s112, %s113
      %p125 = scmp.eq.s32.totalorder %s30, 1
      %p126 = por %p124, %p125
      %p128 = scmp.ne.s32.totalorder %s113, %s127
      %p129 = scmp.eq.s32.totalorder %s30, 0
      %p130 = por %p128, %p129
      %s132 = sadd.s32 %s131, 1
      %p135 = scmp.eq.s32.totalorder %s24, 1
      %p136 = scmp.ne.s32.totalorder %s131, %s133
      %p137 = scmp.eq.s32.totalorder %s24, 0
      %p138 = por %p136, %p137
      %p139 = scmp.ne.s32.totalorder %s131, %s133
      %p140 = scmp.eq.s32.totalorder %s29, 1
      %p141 = por %p139, %p140
      %p142 = scmp.ne.s32.totalorder %s133, %s134
      %p143 = scmp.eq.s32.totalorder %s29, 0
      %p144 = por %p142, %p143
      %p145 = scmp.ne.s32.totalorder %s133, %s134
      %p146 = scmp.eq.s32.totalorder %s30, 1
      %p147 = por %p145, %p146
      %p149 = scmp.ne.s32.totalorder %s134, %s148
      %p150 = scmp.eq.s32.totalorder %s30, 0
      %p151 = por %p149, %p150
      %s153 = sadd.s32 %s152, 1
      %p156 = scmp.eq.s32.totalorder %s24, 1
      %p157 = scmp.ne.s32.totalorder %s152, %s154
      %p158 = scmp.eq.s32.totalorder %s24, 0
      %p159 = por %p157, %p158
      %p160 = scmp.ne.s32.totalorder %s152, %s154
      %p161 = scmp.eq.s32.totalorder %s29, 1
      %p162 = por %p160, %p161
      %p163 = scmp.ne.s32.totalorder %s154, %s155
      %p164 = scmp.eq.s32.totalorder %s29, 0
      %p165 = por %p163, %p164
      %p166 = scmp.ne.s32.totalorder %s154, %s155
      %p167 = scmp.eq.s32.totalorder %s30, 1
      %p168 = por %p166, %p167
      %p170 = scmp.ne.s32.totalorder %s155, %s169
      %p171 = scmp.eq.s32.totalorder %s30, 0
      %p172 = por %p170, %p171
      %s174 = sadd.s32 %s173, 1
      %p177 = scmp.eq.s32.totalorder %s24, 1
      %p178 = scmp.ne.s32.totalorder %s173, %s175
      %p179 = scmp.eq.s32.totalorder %s24, 0
      %p180 = por %p178, %p179
      %p181 = scmp.ne.s32.totalorder %s173, %s175
      %p182 = scmp.eq.s32.totalorder %s29, 1
      %p183 = por %p181, %p182
      %p184 = scmp.ne.s32.totalorder %s175, %s176
      %p185 = scmp.eq.s32.totalorder %s29, 0
      %p186 = por %p184, %p185
      %p187 = scmp.ne.s32.totalorder %s175, %s176
      %p188 = scmp.eq.s32.totalorder %s30, 1
      %p189 = por %p187, %p188
      %p191 = scmp.ne.s32.totalorder %s176, %s190
      %p192 = scmp.eq.s32.totalorder %s30, 0
      %p193 = por %p191, %p192
      %s194 = ssub.s32 %s24, %s31
      %p195 = scmp.eq.s32.totalorder %s194, 0
      %s197 = sadd.s32 %s196, 1
      %s198 = scalar_select %p195, %s196, %s197
      %p201 = pneg %p195
      %p202 = scmp.eq.s32.totalorder %s24, 1
      %p203 = por %p201, %p202
      %p204 = scmp.ne.s32.totalorder %s196, %s199
      %p205 = scmp.eq.s32.totalorder %s24, 0
      %p206 = por %p204, %p205
      %p207 = scmp.ne.s32.totalorder %s196, %s199
      %p208 = scmp.eq.s32.totalorder %s29, 1
      %p209 = por %p207, %p208
      %p210 = scmp.ne.s32.totalorder %s199, %s200
      %p211 = scmp.eq.s32.totalorder %s29, 0
      %p212 = por %p210, %p211
      %p213 = scmp.ne.s32.totalorder %s199, %s200
      %p214 = scmp.eq.s32.totalorder %s30, 1
      %p215 = por %p213, %p214
      %p217 = scmp.ne.s32.totalorder %s200, %s216
      %p218 = scmp.eq.s32.totalorder %s30, 0
      %p219 = por %p217, %p218
      %s220 = ssub.s32 %s24, %s31
      %p221 = scmp.eq.s32.totalorder %s220, 0
      %s223 = sadd.s32 %s222, 1
      %s224 = scalar_select %p221, %s222, %s223
      %p227 = pneg %p221
      %p228 = scmp.eq.s32.totalorder %s24, 1
      %p229 = por %p227, %p228
      %p230 = scmp.ne.s32.totalorder %s222, %s225
      %p231 = scmp.eq.s32.totalorder %s24, 0
      %p232 = por %p230, %p231
      %p233 = scmp.ne.s32.totalorder %s222, %s225
      %p234 = scmp.eq.s32.totalorder %s29, 1
      %p235 = por %p233, %p234
      %p236 = scmp.ne.s32.totalorder %s225, %s226
      %p237 = scmp.eq.s32.totalorder %s29, 0
      %p238 = por %p236, %p237
      %p239 = scmp.ne.s32.totalorder %s225, %s226
      %p240 = scmp.eq.s32.totalorder %s30, 1
      %p241 = por %p239, %p240
      %p243 = scmp.ne.s32.totalorder %s226, %s242
      %p244 = scmp.eq.s32.totalorder %s30, 0
      %p245 = por %p243, %p244
      %p246 = scmp.le.s32.totalorder 1, %s24
      %p247 = scmp.lt.s32.totalorder %s24, 3
      %p248 = pnand %p246, %p247
      %p249 = pneg %p248
      // Predicated region
      $region9: #{tpu_custom_call.1} parent=5 // pred_check
        _
      $region10: #{tpu_custom_call.1} parent=5 // pred_check_branch
        %251 = sbr.rel (%p248) target = $region12
      $region11: #{tpu_custom_call.1} parent=5 // pred_region
        %s252 = ssub.s32 %s24, 1
        // Predicated region
        $region13: #{tpu_custom_call.1} parent=11 // pred_check
          %p253 = pneg %p123
        $region14: #{tpu_custom_call.1} parent=11 // pred_check_branch
          %255 = sbr.rel (%p253) target = $region16
        $region15: #{tpu_custom_call.1} parent=11 // pred_region
          %s257 = ssub.s32 512, 512
          %258 = vsyncadd [#allocation6], %s257
          %s259 = sshll.u32 [#allocation7], 4
          %s260 = int_to_ptr.vmem [resolvable:$true] %s259
          %265 = dma.hbm_to_vmem [thread:$0]  %s3, 512, %s260, [#allocation6], 128, 128, 8
        $region16: #{tpu_custom_call.1} parent=11 // pred_fallthru
          _
        // Predicated region
        $region17: #{tpu_custom_call.1} parent=11 // pred_check
          %p266 = pneg %p144
        $region18: #{tpu_custom_call.1} parent=11 // pred_check_branch
          %268 = sbr.rel (%p266) target = $region20
        $region19: #{tpu_custom_call.1} parent=11 // pred_region
          _
        $region20: #{tpu_custom_call.1} parent=11 // pred_fallthru
          _
        // Predicated region
        $region21: #{tpu_custom_call.1} parent=11 // pred_check
          %p269 = pneg %p165
        $region22: #{tpu_custom_call.1} parent=11 // pred_check_branch
          %271 = sbr.rel (%p269) target = $region24
        $region23: #{tpu_custom_call.1} parent=11 // pred_region
          _
        $region24: #{tpu_custom_call.1} parent=11 // pred_fallthru
          _
        // Predicated region
        $region25: #{tpu_custom_call.1} parent=11 // pred_check
          %p272 = pneg %p186
        $region26: #{tpu_custom_call.1} parent=11 // pred_check_branch
          %274 = sbr.rel (%p272) target = $region28
        $region27: #{tpu_custom_call.1} parent=11 // pred_region
          _
        $region28: #{tpu_custom_call.1} parent=11 // pred_fallthru
          _
      $region12: #{tpu_custom_call.1} parent=5 // pred_fallthru
        _
      %p275 = scmp.lt.s32.totalorder %s24, 2
      // Predicated region
      $region29: #{tpu_custom_call.1} parent=5 // pred_check
        %p276 = pneg %p275
      $region30: #{tpu_custom_call.1} parent=5 // pred_check_branch
        %278 = sbr.rel (%p276) target = $region32
      $region31: #{tpu_custom_call.1} parent=5 // pred_region
        // Predicated region
        $region33: #{tpu_custom_call.1} parent=31 // pred_check
          %p279 = pneg %p44
        $region34: #{tpu_custom_call.1} parent=31 // pred_check_branch
          %281 = sbr.rel (%p279) target = $region36
        $region35: #{tpu_custom_call.1} parent=31 // pred_region
          %s282 = sand.u32 %s34, 1
          %s283 = scalar_lea.sflag [#allocation3], %s282
          %s284 = sand.u32 %s34, 1
          %s285 = smul.addr %s284, 64
          %s286 = scalar_lea.vmem [#allocation2], %s285
          %s287 = smul.u32 8, %s24
          %s289 = ssub.s32 1024, 1024
          %290 = vsyncadd %s283, %s289
          %s291 = smul.addr %s287, 2
          %s292 = smul.addr %s291, 64
          %s293 = scalar_lea.hbm %s0, %s292
          %s294 = sshll.u32 %s286, 4
          %s295 = int_to_ptr.vmem [resolvable:$true] %s294
          %300 = dma.hbm_to_vmem [thread:$0]  %s293, 1024, %s295, %s283, 64, 64, 4
        $region36: #{tpu_custom_call.1} parent=31 // pred_fallthru
          _
        // Predicated region
        $region37: #{tpu_custom_call.1} parent=31 // pred_check
          %p301 = pneg %p70
        $region38: #{tpu_custom_call.1} parent=31 // pred_check_branch
          %303 = sbr.rel (%p301) target = $region40
        $region39: #{tpu_custom_call.1} parent=31 // pred_region
          %s304 = sand.u32 %s24, 1
          %s305 = scalar_lea.sflag [#allocation6], %s304
          %s306 = sand.u32 %s60, 1
          %s307 = smul.addr %s306, 8
          %s308 = scalar_lea.vmem [#allocation5], %s307
          %s310 = ssub.s32 128, 128
          %311 = vsyncadd %s305, %s310
          %s312 = smul.addr %s24, 128
          %s313 = scalar_lea.hbm %s1, %s312
          %s315 = sshll.u32 %s308, 4
          %s316 = int_to_ptr.vmem [resolvable:$true] %s315
          %318 = dma.hbm_to_vmem [thread:$0]  %s313, 128, %s316, %s305
        $region40: #{tpu_custom_call.1} parent=31 // pred_fallthru
          _
        // Predicated region
        $region41: #{tpu_custom_call.1} parent=31 // pred_check
          %p319 = pneg %p96
        $region42: #{tpu_custom_call.1} parent=31 // pred_check_branch
          %321 = sbr.rel (%p319) target = $region44
        $region43: #{tpu_custom_call.1} parent=31 // pred_region
          %p322 = scmp.lt.s32.totalorder %s24, 1
          %s323 = scalar_select %p322, %s24, 1
          %s324 = smul.addr %s323, 8
          %s325 = scalar_lea.vmem %s2, %s324
        $region44: #{tpu_custom_call.1} parent=31 // pred_fallthru
          _
      $region32: #{tpu_custom_call.1} parent=5 // pred_fallthru
        _
      %p326 = scmp.le.s32.totalorder 1, %s24
      %p327 = scmp.lt.s32.totalorder %s24, 3
      %p328 = pnand %p326, %p327
      %p329 = pneg %p328
      // Predicated region
      $region45: #{tpu_custom_call.1} parent=5 // pred_check
        _
      $region46: #{tpu_custom_call.1} parent=5 // pred_check_branch
        %331 = sbr.rel (%p328) target = $region48
      $region47: #{tpu_custom_call.1} parent=5 // pred_region
        %s332 = ssub.s32 %s24, 1
        %s333 = sand.u32 %s37, 1
        %s334 = scalar_lea.sflag [#allocation3], %s333
        %s335 = sand.u32 %s37, 1
        %s336 = smul.addr %s335, 64
        %s337 = scalar_lea.vmem [#allocation2], %s336
        // Predicated region
        $region49: #{tpu_custom_call.1} parent=47 // pred_check
          %p338 = pneg %p50
        $region50: #{tpu_custom_call.1} parent=47 // pred_check_branch
          %340 = sbr.rel (%p338) target = $region52
        $region51: #{tpu_custom_call.1} parent=47 // pred_region
          %341 = dma.done %s334, 1024
        $region52: #{tpu_custom_call.1} parent=47 // pred_fallthru
          _
        %s342 = sand.u32 %s29, 1
        %s343 = scalar_lea.sflag [#allocation6], %s342
        %s344 = sand.u32 %s63, 1
        %s345 = smul.addr %s344, 8
        %s346 = scalar_lea.vmem [#allocation5], %s345
        // Predicated region
        $region53: #{tpu_custom_call.1} parent=47 // pred_check
          %p347 = pneg %p76
        $region54: #{tpu_custom_call.1} parent=47 // pred_check_branch
          %349 = sbr.rel (%p347) target = $region56
        $region55: #{tpu_custom_call.1} parent=47 // pred_region
          %350 = dma.done %s343, 128
        $region56: #{tpu_custom_call.1} parent=47 // pred_fallthru
          _
        // Predicated region
        $region57: #{tpu_custom_call.1} parent=47 // pred_check
          %p351 = pneg %p123
        $region58: #{tpu_custom_call.1} parent=47 // pred_check_branch
          %353 = sbr.rel (%p351) target = $region60
        $region59: #{tpu_custom_call.1} parent=47 // pred_region
          %354 = dma.done [#allocation6], 512
        $region60: #{tpu_custom_call.1} parent=47 // pred_fallthru
          _
        %s355 = sand.u32 %s37, 1
        %s356 = scalar_lea.sflag [#allocation3], %s355
        %s357 = sand.u32 %s37, 1
        %s358 = smul.addr %s357, 64
        %s359 = scalar_lea.vmem [#allocation2], %s358
        %p360 = pneg %p50
        %p361 = pneg %p47
        %s362 = sand.u32 %s29, 1
        %s363 = scalar_lea.sflag [#allocation6], %s362
        %s364 = sand.u32 %s63, 1
        %s365 = smul.addr %s364, 8
        %s366 = scalar_lea.vmem [#allocation5], %s365
        %p367 = pneg %p76
        %p368 = pneg %p73
        %p369 = scmp.lt.s32.totalorder %s29, 1
        %s370 = scalar_select %p369, %s29, 1
        %s371 = smul.addr %s370, 8
        %s372 = scalar_lea.vmem %s2, %s371
        %p373 = pneg %p102
        %p374 = pneg %p99
        %p375 = pneg %p123
        %p376 = pneg %p120
        %p377 = pneg %p144
        %p378 = pneg %p141
        %p379 = pneg %p165
        %p380 = pneg %p162
        %p381 = pneg %p186
        %p382 = pneg %p183
        %p383 = pneg %p212
        %p384 = pneg %p209
        %s385 = sand.u32 %s199, 1
        %s386 = scalar_lea.sflag [#allocation4], %s385
        %s387 = sand.u32 %s199, 1
        %s388 = smul.addr %s387, 8
        %s389 = scalar_lea.vmem [#allocation8], %s388
        %p390 = pneg %p238
        %p391 = pneg %p235
        %p392 = scmp.lt.s32.totalorder %s29, 1
        %s393 = scalar_select %p392, %s29, 1
        %s394 = smul.addr %s393, 8
        %s395 = scalar_lea.vmem %s8, %s394
        %s396 = smul.u32 8, %s29
        %p397 = scmp.lt.s32.totalorder %s29, 1
        %s398 = scalar_select %p397, %s29, 1
        %s399 = smul.addr %s398, 8
        %s400 = scalar_lea.vmem %s2, %s399
        %p401 = scmp.lt.s32.totalorder %s29, 1
        %s402 = scalar_select %p401, %s29, 1
        %s403 = smul.addr %s402, 8
        %s404 = scalar_lea.vmem %s8, %s403
        %v405 = vld [vmem:[%s337] sm:$0xf]
        %v406 = vld [vmem:[%s337 + $0x4] sm:$0xf]
        %v407 = vld [vmem:[%s337 + $0x8] sm:$0xf]
        %v408 = vld [vmem:[%s337 + $0xc] sm:$0xf]
        %v409 = vld [vmem:[%s337 + $0x10] sm:$0xf]
        %v410 = vld [vmem:[%s337 + $0x14] sm:$0xf]
        %v411 = vld [vmem:[%s337 + $0x18] sm:$0xf]
        %v412 = vld [vmem:[%s337 + $0x1c] sm:$0xf]
        %v413 = vld [vmem:[%s337 + $0x20] sm:$0xf]
        %v414 = vld [vmem:[%s337 + $0x24] sm:$0xf]
        %v415 = vld [vmem:[%s337 + $0x28] sm:$0xf]
        %v416 = vld [vmem:[%s337 + $0x2c] sm:$0xf]
        %v417 = vld [vmem:[%s337 + $0x30] sm:$0xf]
        %v418 = vld [vmem:[%s337 + $0x34] sm:$0xf]
        %v419 = vld [vmem:[%s337 + $0x38] sm:$0xf]
        %v420 = vld [vmem:[%s337 + $0x3c] sm:$0xf]
        %v421 = vld [vmem:[%s346] sm:$0xff]
        %v422 = vcvt.s32.f32 %v421
        %v423 = vlaneseq
        %v424 = vand.u32 %v423, 127
        %vm425 = vcmp.ge.s32.totalorder %v424, 3
        %v426 = vsel %vm425, %v422, 0.0
        %v427 = vunpack.c.l.bf16 %v405
        %v428 = vunpack.c.l.bf16 %v406
        %v429 = vunpack.c.l.bf16 %v407
        %v430 = vunpack.c.l.bf16 %v408
        %v431 = vunpack.c.l.bf16 %v409
        %v432 = vunpack.c.l.bf16 %v410
        %v433 = vunpack.c.l.bf16 %v411
        %v434 = vunpack.c.l.bf16 %v412
        %v435 = vunpack.c.l.bf16 %v413
        %v436 = vunpack.c.l.bf16 %v414
        %v437 = vunpack.c.l.bf16 %v415
        %v438 = vunpack.c.l.bf16 %v416
        %v439 = vunpack.c.l.bf16 %v417
        %v440 = vunpack.c.l.bf16 %v418
        %v441 = vunpack.c.l.bf16 %v419
        %v442 = vunpack.c.l.bf16 %v420
        %v443 = vlaneseq
        %v444 = vshrl.u32 %v443, 7
        %v445 = vsub.s32 0, %v444
        %v446 = vrot.slane %v426, %v445
        %448 = vbcast.lane.b32.xlu0 %v446, 256
        %v449 = vpop.permute.xlu0 %448
        %s451 = sor.u32 256, 8
        %452 = vbcast.lane.b32.xlu0 %v446, %s451
        %v453 = vpop.permute.xlu0 %452
        %v454 = vlaneseq
        %v455 = vshrl.u32 %v454, 7
        %v456 = vsub.s32 1, %v455
        %v457 = vrot.slane %v426, %v456
        %459 = vbcast.lane.b32.xlu0 %v457, 256
        %v460 = vpop.permute.xlu0 %459
        %s462 = sor.u32 256, 8
        %463 = vbcast.lane.b32.xlu0 %v457, %s462
        %v464 = vpop.permute.xlu0 %463
        %v465 = vlaneseq
        %v466 = vshrl.u32 %v465, 7
        %v467 = vsub.s32 2, %v466
        %v468 = vrot.slane %v426, %v467
        %470 = vbcast.lane.b32.xlu0 %v468, 256
        %v471 = vpop.permute.xlu0 %470
        %s473 = sor.u32 256, 8
        %474 = vbcast.lane.b32.xlu0 %v468, %s473
        %v475 = vpop.permute.xlu0 %474
        %v476 = vlaneseq
        %v477 = vshrl.u32 %v476, 7
        %v478 = vsub.s32 3, %v477
        %v479 = vrot.slane %v426, %v478
        %481 = vbcast.lane.b32.xlu0 %v479, 256
        %v482 = vpop.permute.xlu0 %481
        %s484 = sor.u32 256, 8
        %485 = vbcast.lane.b32.xlu0 %v479, %s484
        %v486 = vpop.permute.xlu0 %485
        %v487 = vlaneseq
        %v488 = vshrl.u32 %v487, 7
        %v489 = vsub.s32 4, %v488
        %v490 = vrot.slane %v426, %v489
        %492 = vbcast.lane.b32.xlu0 %v490, 256
        %v493 = vpop.permute.xlu0 %492
        %s495 = sor.u32 256, 8
        %496 = vbcast.lane.b32.xlu0 %v490, %s495
        %v497 = vpop.permute.xlu0 %496
        %v498 = vlaneseq
        %v499 = vshrl.u32 %v498, 7
        %v500 = vsub.s32 5, %v499
        %v501 = vrot.slane %v426, %v500
        %503 = vbcast.lane.b32.xlu0 %v501, 256
        %v504 = vpop.permute.xlu0 %503
        %s506 = sor.u32 256, 8
        %507 = vbcast.lane.b32.xlu0 %v501, %s506
        %v508 = vpop.permute.xlu0 %507
        %v509 = vlaneseq
        %v510 = vshrl.u32 %v509, 7
        %v511 = vsub.s32 6, %v510
        %v512 = vrot.slane %v426, %v511
        %514 = vbcast.lane.b32.xlu0 %v512, 256
        %v515 = vpop.permute.xlu0 %514
        %s517 = sor.u32 256, 8
        %518 = vbcast.lane.b32.xlu0 %v512, %s517
        %v519 = vpop.permute.xlu0 %518
        %v520 = vlaneseq
        %v521 = vshrl.u32 %v520, 7
        %v522 = vsub.s32 7, %v521
        %v523 = vrot.slane %v426, %v522
        %525 = vbcast.lane.b32.xlu0 %v523, 256
        %v526 = vpop.permute.xlu0 %525
        %s528 = sor.u32 256, 8
        %529 = vbcast.lane.b32.xlu0 %v523, %s528
        %v530 = vpop.permute.xlu0 %529
        %v531 = vmul.f32 %v427, %v449
        %v532 = vmul.f32 %v428, %v453
        %v533 = vmul.f32 %v429, %v460
        %v534 = vmul.f32 %v430, %v464
        %v535 = vmul.f32 %v431, %v471
        %v536 = vmul.f32 %v432, %v475
        %v537 = vmul.f32 %v433, %v482
        %v538 = vmul.f32 %v434, %v486
        %v539 = vmul.f32 %v435, %v493
        %v540 = vmul.f32 %v436, %v497
        %v541 = vmul.f32 %v437, %v504
        %v542 = vmul.f32 %v438, %v508
        %v543 = vmul.f32 %v439, %v515
        %v544 = vmul.f32 %v440, %v519
        %v545 = vmul.f32 %v441, %v526
        %v546 = vmul.f32 %v442, %v530
        %vm547 = vcmask 261120
        %v548 = vsel %vm547, %v531, 0.0
        %v549 = vsel %vm547, %v532, 0.0
        %v550 = vadd.f32 %v548, %v549
        %v551 = vrot.slane %v550, 4
        %v552 = vadd.f32 %v550, %v551
        %v553 = vrot.slane %v552, 2
        %v554 = vadd.f32 %v552, %v553
        %v555 = vrot.slane %v554, 1
        %v556 = vadd.f32 %v554, %v555
        %v557 = vsel %vm547, %v533, 0.0
        %v558 = vsel %vm547, %v534, 0.0
        %v559 = vadd.f32 %v557, %v558
        %v560 = vrot.slane %v559, 4
        %v561 = vadd.f32 %v559, %v560
        %v562 = vrot.slane %v561, 2
        %v563 = vadd.f32 %v561, %v562
        %v564 = vrot.slane %v563, 1
        %v565 = vadd.f32 %v563, %v564
        %v566 = vsel %vm547, %v535, 0.0
        %v567 = vsel %vm547, %v536, 0.0
        %v568 = vadd.f32 %v566, %v567
        %v569 = vrot.slane %v568, 4
        %v570 = vadd.f32 %v568, %v569
        %v571 = vrot.slane %v570, 2
        %v572 = vadd.f32 %v570, %v571
        %v573 = vrot.slane %v572, 1
        %v574 = vadd.f32 %v572, %v573
        %v575 = vsel %vm547, %v537, 0.0
        %v576 = vsel %vm547, %v538, 0.0
        %v577 = vadd.f32 %v575, %v576
        %v578 = vrot.slane %v577, 4
        %v579 = vadd.f32 %v577, %v578
        %v580 = vrot.slane %v579, 2
        %v581 = vadd.f32 %v579, %v580
        %v582 = vrot.slane %v581, 1
        %v583 = vadd.f32 %v581, %v582
        %v584 = vsel %vm547, %v539, 0.0
        %v585 = vsel %vm547, %v540, 0.0
        %v586 = vadd.f32 %v584, %v585
        %v587 = vrot.slane %v586, 4
        %v588 = vadd.f32 %v586, %v587
        %v589 = vrot.slane %v588, 2
        %v590 = vadd.f32 %v588, %v589
        %v591 = vrot.slane %v590, 1
        %v592 = vadd.f32 %v590, %v591
        %v593 = vsel %vm547, %v541, 0.0
        %v594 = vsel %vm547, %v542, 0.0
        %v595 = vadd.f32 %v593, %v594
        %v596 = vrot.slane %v595, 4
        %v597 = vadd.f32 %v595, %v596
        %v598 = vrot.slane %v597, 2
        %v599 = vadd.f32 %v597, %v598
        %v600 = vrot.slane %v599, 1
        %v601 = vadd.f32 %v599, %v600
        %v602 = vsel %vm547, %v543, 0.0
        %v603 = vsel %vm547, %v544, 0.0
        %v604 = vadd.f32 %v602, %v603
        %v605 = vrot.slane %v604, 4
        %v606 = vadd.f32 %v604, %v605
        %v607 = vrot.slane %v606, 2
        %v608 = vadd.f32 %v606, %v607
        %v609 = vrot.slane %v608, 1
        %v610 = vadd.f32 %v608, %v609
        %v611 = vsel %vm547, %v545, 0.0
        %v612 = vsel %vm547, %v546, 0.0
        %v613 = vadd.f32 %v611, %v612
        %v614 = vrot.slane %v613, 4
        %v615 = vadd.f32 %v613, %v614
        %v616 = vrot.slane %v615, 2
        %v617 = vadd.f32 %v615, %v616
        %v618 = vrot.slane %v617, 1
        %v619 = vadd.f32 %v617, %v618
        %vm620 = vcmask 130048
        %v621 = vsel %vm620, %v426, 0.0
        %622 = vadd.xlane.f32.xlu0 %v621
        %v623 = vpop.xlane.xlu0 %622
        %vm624 = vcmp.gt.f32.partialorder %v623, 0.0
        %v625 = vsel %vm624, %v623, 1.0
        %v627 = vrot.slane %v625, 1
        %v628 = vrot.slane %v625, 2
        %v629 = vrot.slane %v625, 3
        %v630 = vrot.slane %v625, 4
        %v631 = vrot.slane %v625, 5
        %v632 = vrot.slane %v625, 6
        %v633 = vrot.slane %v625, 7
        %v642 = vrcp.pop %v625
        %v643 = vmul.f32 %v556, %v642
        %v644 = vrcp.pop %v627
        %v645 = vmul.f32 %v565, %v644
        %v646 = vrcp.pop %v628
        %v647 = vmul.f32 %v574, %v646
        %v648 = vrcp.pop %v629
        %v649 = vmul.f32 %v583, %v648
        %v650 = vrcp.pop %v630
        %v651 = vmul.f32 %v592, %v650
        %v652 = vrcp.pop %v631
        %v653 = vmul.f32 %v601, %v652
        %v654 = vrcp.pop %v632
        %v655 = vmul.f32 %v610, %v654
        %v656 = vrcp.pop %v633
        %v657 = vmul.f32 %v619, %v656
        %v658 = vld [vmem:[#allocation7] sm:$0xff]
        %v659 = vld [vmem:[#allocation7 + $0x8] sm:$0xff]
        %v660 = vld [vmem:[#allocation7 + $0x10] sm:$0xff]
        %v661 = vld [vmem:[#allocation7 + $0x18] sm:$0xff]
        %v662 = vld [vmem:[%s4] sm:$0xff]
        %v663 = vld [vmem:[%s4 + $0x8] sm:$0xff]
        %v664 = vld [vmem:[%s4 + $0x10] sm:$0xff]
        %v665 = vld [vmem:[%s4 + $0x18] sm:$0xff]
        %v674 = vrot.slane %v645, 7
        %vm675 = vcmask 1041409
        %v676 = vsel %vm675, %v674, %v643
        %v677 = vrot.slane %v647, 6
        %vm678 = vcmask 1042434
        %v679 = vsel %vm678, %v677, %v676
        %v680 = vrot.slane %v649, 5
        %vm681 = vcmask 1043459
        %v682 = vsel %vm681, %v680, %v679
        %v683 = vrot.slane %v651, 4
        %vm684 = vcmask 1044484
        %v685 = vsel %vm684, %v683, %v682
        %v686 = vrot.slane %v653, 3
        %vm687 = vcmask 1045509
        %v688 = vsel %vm687, %v686, %v685
        %v689 = vrot.slane %v655, 2
        %vm690 = vcmask 1046534
        %v691 = vsel %vm690, %v689, %v688
        %v692 = vrot.slane %v657, 1
        %vm693 = vcmask 1047559
        %v694 = vsel %vm693, %v692, %v691
        %v695 = vsel %vm547, %v694, 0
        %697 = vmatprep.subr.mxu0 0.0
        %698 = vmatpush1.msra.mxu0 %v662
        %699 = vmatprep.subr.mxu0 0.0
        %700 = vmatpush1.msra.mxu0 %v663
        %701 = vmatprep.subr.mxu0 0.0
        %702 = vmatpush1.msra.mxu0 %v664
        %703 = vmatprep.subr.mxu0 0.0
        %704 = vmatpush1.msra.mxu0 %v665
        %705 = vmatprep.subr.mxu0 0.0
        %706 = vmatpush1.msra.mxu0 0.0
        %707 = vmatprep.subr.mxu0 0.0
        %708 = vmatpush1.msra.mxu0 0.0
        %709 = vmatprep.subr.mxu0 0.0
        %710 = vmatpush1.msra.mxu0 0.0
        %711 = vmatprep.subr.mxu0 0.0
        %712 = vmatpush1.msra.mxu0 0.0
        %713 = vmatprep.subr.mxu0 0.0
        %714 = vmatpush1.msra.mxu0 0.0
        %715 = vmatprep.subr.mxu0 0.0
        %716 = vmatpush1.msra.mxu0 0.0
        %717 = vmatprep.subr.mxu0 0.0
        %718 = vmatpush1.msra.mxu0 0.0
        %719 = vmatprep.subr.mxu0 0.0
        %720 = vmatpush1.msra.mxu0 0.0
        %721 = vmatprep.subr.mxu0 0.0
        %722 = vmatpush1.msra.mxu0 0.0
        %723 = vmatprep.subr.mxu0 0.0
        %724 = vmatpush1.msra.mxu0 0.0
        %725 = vmatprep.subr.mxu0 0.0
        %726 = vmatpush1.msra.mxu0 0.0
        %727 = vmatprep.subr.mxu0 0.0
        %728 = vmatpush1.msra.mxu0 0.0
        %729 = vmatprep.subr.mxu0 0.0
        %730 = vmatpush1.msra.mxu0 0.0
        %731 = vmatprep.subr.mxu0 0.0
        %732 = vmatpush1.msra.mxu0 0.0
        %733 = vmatprep.subr.mxu0 0.0
        %734 = vmatpush1.msra.mxu0 0.0
        %735 = vmatprep.subr.mxu0 0.0
        %736 = vmatpush1.msra.mxu0 0.0
        %737 = vmatprep.subr.mxu0 0.0
        %738 = vmatpush1.msra.mxu0 0.0
        %739 = vmatprep.subr.mxu0 0.0
        %740 = vmatpush1.msra.mxu0 0.0
        %741 = vmatprep.subr.mxu0 0.0
        %742 = vmatpush1.msra.mxu0 0.0
        %743 = vmatprep.subr.mxu0 0.0
        %744 = vmatpush1.msra.mxu0 0.0
        %745 = vmatprep.subr.mxu0 0.0
        %746 = vmatpush1.msra.mxu0 0.0
        %747 = vmatprep.subr.mxu0 0.0
        %748 = vmatpush1.msra.mxu0 0.0
        %749 = vmatprep.subr.mxu0 0.0
        %750 = vmatpush1.msra.mxu0 0.0
        %751 = vmatprep.subr.mxu0 0.0
        %752 = vmatpush1.msra.mxu0 0.0
        %753 = vmatprep.subr.mxu0 0.0
        %754 = vmatpush1.msra.mxu0 0.0
        %755 = vmatprep.subr.mxu0 0.0
        %756 = vmatpush1.msra.mxu0 0.0
        %757 = vmatprep.subr.mxu0 0.0
        %758 = vmatpush1.msra.mxu0 0.0
        %759 = vmatprep.subr.mxu0 0.0
        %760 = vmatpush1.msra.mxu0 0.0
        %761 = vmatprep.mubr.f32.mxu0 0.0
        %762 = vmatmul.mubr.f32.gmra.mrb[0].mxu0 %v695
        %v763 = vpop.f32.mrb[0].mxu0
        %v764 = vadd.f32 0.0, %v763
        %v765 = vpop.f32.mrb[0].mxu0
        %766 = vdwg.mxu0
        %v775 = vrot.slane %v427, 1
        %v776 = vsel %vm675, %v429, %v775
        %v777 = vrot.slane %v431, 7
        %v778 = vsel %vm678, %v777, %v776
        %v779 = vrot.slane %v433, 6
        %v780 = vsel %vm681, %v779, %v778
        %v781 = vrot.slane %v435, 5
        %v782 = vsel %vm684, %v781, %v780
        %v783 = vrot.slane %v437, 4
        %v784 = vsel %vm687, %v783, %v782
        %v785 = vrot.slane %v439, 3
        %v786 = vsel %vm690, %v785, %v784
        %v787 = vrot.slane %v441, 2
        %v788 = vsel %vm693, %v787, %v786
        %v789 = vsel %vm547, %v788, 0
        %791 = vmatprep.subr.mxu0 0.0
        %792 = vmatpush1.msra.mxu0 %v658
        %793 = vmatprep.subr.mxu0 0.0
        %794 = vmatpush1.msra.mxu0 %v659
        %795 = vmatprep.subr.mxu0 0.0
        %796 = vmatpush1.msra.mxu0 %v660
        %797 = vmatprep.subr.mxu0 0.0
        %798 = vmatpush1.msra.mxu0 %v661
        %799 = vmatprep.subr.mxu0 0.0
        %800 = vmatpush1.msra.mxu0 0.0
        %801 = vmatprep.subr.mxu0 0.0
        %802 = vmatpush1.msra.mxu0 0.0
        %803 = vmatprep.subr.mxu0 0.0
        %804 = vmatpush1.msra.mxu0 0.0
        %805 = vmatprep.subr.mxu0 0.0
        %806 = vmatpush1.msra.mxu0 0.0
        %807 = vmatprep.subr.mxu0 0.0
        %808 = vmatpush1.msra.mxu0 0.0
        %809 = vmatprep.subr.mxu0 0.0
        %810 = vmatpush1.msra.mxu0 0.0
        %811 = vmatprep.subr.mxu0 0.0
        %812 = vmatpush1.msra.mxu0 0.0
        %813 = vmatprep.subr.mxu0 0.0
        %814 = vmatpush1.msra.mxu0 0.0
        %815 = vmatprep.subr.mxu0 0.0
        %816 = vmatpush1.msra.mxu0 0.0
        %817 = vmatprep.subr.mxu0 0.0
        %818 = vmatpush1.msra.mxu0 0.0
        %819 = vmatprep.subr.mxu0 0.0
        %820 = vmatpush1.msra.mxu0 0.0
        %821 = vmatprep.subr.mxu0 0.0
        %822 = vmatpush1.msra.mxu0 0.0
        %823 = vmatprep.subr.mxu0 0.0
        %824 = vmatpush1.msra.mxu0 0.0
        %825 = vmatprep.subr.mxu0 0.0
        %826 = vmatpush1.msra.mxu0 0.0
        %827 = vmatprep.subr.mxu0 0.0
        %828 = vmatpush1.msra.mxu0 0.0
        %829 = vmatprep.subr.mxu0 0.0
        %830 = vmatpush1.msra.mxu0 0.0
        %831 = vmatprep.subr.mxu0 0.0
        %832 = vmatpush1.msra.mxu0 0.0
        %833 = vmatprep.subr.mxu0 0.0
        %834 = vmatpush1.msra.mxu0 0.0
        %835 = vmatprep.subr.mxu0 0.0
        %836 = vmatpush1.msra.mxu0 0.0
        %837 = vmatprep.subr.mxu0 0.0
        %838 = vmatpush1.msra.mxu0 0.0
        %839 = vmatprep.subr.mxu0 0.0
        %840 = vmatpush1.msra.mxu0 0.0
        %841 = vmatprep.subr.mxu0 0.0
        %842 = vmatpush1.msra.mxu0 0.0
        %843 = vmatprep.subr.mxu0 0.0
        %844 = vmatpush1.msra.mxu0 0.0
        %845 = vmatprep.subr.mxu0 0.0
        %846 = vmatpush1.msra.mxu0 0.0
        %847 = vmatprep.subr.mxu0 0.0
        %848 = vmatpush1.msra.mxu0 0.0
        %849 = vmatprep.subr.mxu0 0.0
        %850 = vmatpush1.msra.mxu0 0.0
        %851 = vmatprep.subr.mxu0 0.0
        %852 = vmatpush1.msra.mxu0 0.0
        %853 = vmatprep.subr.mxu0 0.0
        %854 = vmatpush1.msra.mxu0 0.0
        %855 = vmatprep.mubr.f32.mxu0 0.0
        %856 = vmatmul.mubr.f32.gmra.mrb[0].mxu0 %v789
        %v857 = vpop.f32.mrb[0].mxu0
        %v858 = vadd.f32 %v764, %v857
        %v859 = vpop.f32.mrb[0].mxu0
        %860 = vdwg.mxu0
        %v861 = vld [vmem:[%s5] sm:$0x1]
        %v863 = vlaneseq
        %v864 = vshrl.u32 %v863, 7
        %v865 = vsub.s32 0, %v864
        %v866 = vrot.slane %v861, %v865
        %v868 = vadd.f32 %v858, %v866
        %869 = vst [vmem:[%s389] sm:$0xff] %v868
        %870 = vmax.xlane.f32.xlu0 %v868
        %v871 = vpop.xlane.xlu0 %870
        %v872 = vsub.f32 %v868, %v871
        %v873 = vmul.f32 %v872, 1.442695
        %v874 = vpow.pop %v873
        %875 = vadd.xlane.f32.xlu0 %v874
        %v876 = vpop.xlane.xlu0 %875
        %v877 = vrcp.pop %v876
        %v878 = vmul.f32 %v874, %v877
        %v879 = vld [vmem:[%s400] sm:$0xff]
        %880 = vset.pattern.permute.xlu0 0
        %881 = vperm.xlu0 %880, %v879
        %v882 = vpop.permute.xlu0 %881
        %vm883 = vcmp.eq.s32.totalorder %v424, %v882
        %v884 = vsel %vm883, 1, 0
        %v885 = vcvt.s32.f32 %v884
        %v886 = vmul.f32 %v878, %v885
        %887 = vadd.xlane.f32.xlu0 %v886
        %v888 = vpop.xlane.xlu0 %887
        %v889 = vpow.f32 %v888, 0.4
        %v890 = vsub.f32 1.0, %v889
        %v891 = vrcp.pop 0.4
        %v892 = vmul.f32 %v890, %v891
        %v893 = vld [vmem:[%s6] sm:$0x1]
        %v895 = vlaneseq
        %v896 = vshrl.u32 %v895, 7
        %v897 = vsub.s32 0, %v896
        %v898 = vrot.slane %v893, %v897
        %v900 = vmul.f32 %v898, %v885
        %901 = vadd.xlane.f32.xlu0 %v900
        %v902 = vpop.xlane.xlu0 %901
        %s903 = smul.u32 %s29, 8
        %v904 = vlaneseq
        %v905 = vshrl.u32 %v904, 7
        %v906 = vstv %s903
        %v907 = vadd.s32 %v906, %v905
        %v908 = vmul.f32 %v892, 0.0
        %v909 = vmul.f32 %v892, %v902
        %v910 = vadd.f32 %v908, %v909
        %vm911 = vcmp.lt.s32.totalorder %v907, 10
        %v912 = vsel %vm911, %v910, 0.0
        %vm913 = vcmask 7168
        %914 = vst.msk [vmem:[%s404] sm:$0xff] %vm913, %v912
        %s915 = sand.u32 %s199, 1
        %s916 = scalar_lea.sflag [#allocation4], %s915
        %s917 = sand.u32 %s199, 1
        %s918 = smul.addr %s917, 8
        %s919 = scalar_lea.vmem [#allocation8], %s918
        %p920 = scmp.lt.s32.totalorder %s29, 1
        %s921 = scalar_select %p920, %s29, 1
        %s922 = smul.addr %s921, 8
        %s923 = scalar_lea.vmem %s8, %s922
        // Predicated region
        $region61: #{tpu_custom_call.1} parent=47 // pred_check
          %p924 = pneg %p209
        $region62: #{tpu_custom_call.1} parent=47 // pred_check_branch
          %926 = sbr.rel (%p924) target = $region64
        $region63: #{tpu_custom_call.1} parent=47 // pred_region
          %s928 = ssub.s32 128, 128
          %929 = vsyncadd %s916, %s928
          %s930 = smul.addr %s29, 128
          %s931 = scalar_lea.hbm %s7, %s930
          %s933 = sshll.u32 %s919, 4
          %s934 = int_to_ptr.vmem [resolvable:$true] %s933
          %936 = dma.vmem_to_hbm [thread:$0]  %s934, 128, %s931, %s916
        $region64: #{tpu_custom_call.1} parent=47 // pred_fallthru
          _
        // Predicated region
        $region65: #{tpu_custom_call.1} parent=47 // pred_check
          %p937 = pneg %p235
        $region66: #{tpu_custom_call.1} parent=47 // pred_check_branch
          %939 = sbr.rel (%p937) target = $region68
        $region67: #{tpu_custom_call.1} parent=47 // pred_region
          _
        $region68: #{tpu_custom_call.1} parent=47 // pred_fallthru
          _
      $region48: #{tpu_custom_call.1} parent=5 // pred_fallthru
        _
      %p940 = scmp.le.s32.totalorder 2, %s24
      // Predicated region
      $region69: #{tpu_custom_call.1} parent=5 // pred_check
        %p941 = pneg %p940
      $region70: #{tpu_custom_call.1} parent=5 // pred_check_branch
        %943 = sbr.rel (%p941) target = $region72
      $region71: #{tpu_custom_call.1} parent=5 // pred_region
        %s944 = ssub.s32 %s24, 2
        // Predicated region
        $region73: #{tpu_custom_call.1} parent=71 // pred_check
          %p945 = pneg %p215
        $region74: #{tpu_custom_call.1} parent=71 // pred_check_branch
          %947 = sbr.rel (%p945) target = $region76
        $region75: #{tpu_custom_call.1} parent=71 // pred_region
          %s948 = sand.u32 %s200, 1
          %s949 = scalar_lea.sflag [#allocation4], %s948
          %s950 = sand.u32 %s200, 1
          %s951 = smul.addr %s950, 8
          %s952 = scalar_lea.vmem [#allocation8], %s951
          %953 = dma.done %s949, 128
        $region76: #{tpu_custom_call.1} parent=71 // pred_fallthru
          _
        // Predicated region
        $region77: #{tpu_custom_call.1} parent=71 // pred_check
          %p954 = pneg %p241
        $region78: #{tpu_custom_call.1} parent=71 // pred_check_branch
          %956 = sbr.rel (%p954) target = $region80
        $region79: #{tpu_custom_call.1} parent=71 // pred_region
          %p957 = scmp.lt.s32.totalorder %s30, 1
          %s958 = scalar_select %p957, %s30, 1
          %s959 = smul.addr %s958, 8
          %s960 = scalar_lea.vmem %s8, %s959
        $region80: #{tpu_custom_call.1} parent=71 // pred_fallthru
          _
      $region72: #{tpu_custom_call.1} parent=5 // pred_fallthru
        _
    $region6: #{tpu_custom_call.1} parent=1 // loop_footer
      %s28 = sadd.s32 1, %s24
    $region7: #{tpu_custom_call.1} parent=1 // loop_footer_branch
      %23 = sbr.rel target = $region3
    $region8: #{tpu_custom_call.1} parent=1 // loop_exit
      _
    %961 = vsyncpa [#allocation3], 1
    %s962 = scalar_lea.sflag [#allocation3], 1
    %963 = vsyncpa %s962, 1
    %964 = vsyncpa [#allocation6], 1
    %s965 = scalar_lea.sflag [#allocation6], 1
    %966 = vsyncpa %s965, 1
    %967 = vsyncpa [#allocation4], 1
    %s968 = scalar_lea.sflag [#allocation4], 1
    %969 = vsyncpa %s968, 1

</llo_original>
